<compile_context>
chip_gen: v5e
topology: v5e:2x2
jax: 0.10.0
libtpu: 0.0.40
codegen_flags: <defaults>
</compile_context>

<pallas_src>
import numpy as np
import jax
import jax.numpy as jnp
from jax.experimental import pallas as pl
from jax.experimental.pallas import tpu as pltpu

_LANES = 128

# Fixed RGB->YUV matrix from the module's __init__ (registered buffer).
_RGB2YUV_M = np.array(
    [
        [0.299, 0.587, 0.114],
        [-0.14713, -0.28886, 0.436],
        [0.615, -0.51499, -0.10001],
    ],
    dtype=np.float32,
)


def _coeffs(M):
    m = np.asarray(M, dtype=np.float32)
    assert m.shape == (3, 3)
    return [[float(v) for v in row] for row in m]


def _make_lane_dense_kernel(M):
    (m00, m01, m02), (m10, m11, m12), (m20, m21, m22) = _coeffs(M)

    def kernel(x_ref, o_ref):
        # x_ref / o_ref: (b_tile, 3, row_tile, 128) in VMEM.  Full, unmasked
        # lane-dense loads/stores per channel plane.
        r = x_ref[:, 0, :, :]
        g = x_ref[:, 1, :, :]
        b = x_ref[:, 2, :, :]
        o_ref[:, 0, :, :] = m00 * r + m01 * g + m02 * b
        o_ref[:, 1, :, :] = m10 * r + m11 * g + m12 * b
        o_ref[:, 2, :, :] = m20 * r + m21 * g + m22 * b

    return kernel


def _make_channel_sublane_kernel(M):
    (m00, m01, m02), (m10, m11, m12), (m20, m21, m22) = _coeffs(M)

    def kernel(x_ref, o_ref):
        # x_ref / o_ref: (1, 3, tile_n) in VMEM (channels on sublanes).  Only
        # used when H*W % 128 != 0; Pallas masks the ragged tail block, so no
        # wrapper pad/slice HBM round trips are needed.
        r = x_ref[0, 0:1, :]
        g = x_ref[0, 1:2, :]
        b = x_ref[0, 2:3, :]
        o_ref[0, 0:1, :] = m00 * r + m01 * g + m02 * b
        o_ref[0, 1:2, :] = m10 * r + m11 * g + m12 * b
        o_ref[0, 2:3, :] = m20 * r + m21 * g + m22 * b

    return kernel


def _round_up(a, b):
    return ((a + b - 1) // b) * b


def _plan_dense(B, S, itemsize, target_rows):
    """Pick (b_tile, row_tile, grid_b, grid_t) for the lane-dense path."""
    sub = {4: 8, 2: 16, 1: 32}.get(itemsize, 8)      # sublane packing by dtype
    target_rows = max(sub, min(int(target_rows), 4096))
    if S >= target_rows:
        b_tile = 1
        num_tiles = pl.cdiv(S, target_rows)
        row_tile = _round_up(pl.cdiv(S, num_tiles), sub)
    else:
        row_tile = S                                  # == full dim, no alignment needed
        b_tile = max(1, min(B, target_rows // max(S, 1)))
    grid_b = pl.cdiv(B, b_tile)
    grid_t = pl.cdiv(S, row_tile)
    # Megacore (v7x has 2 TensorCores): ensure >= 2 grid points whenever there
    # is enough work to split.  No-op on v5e/v6e.
    if grid_b * grid_t == 1:
        if B >= 2:
            b_tile = pl.cdiv(B, 2)
        elif S >= 2 * sub:
            row_tile = _round_up(pl.cdiv(S, 2), sub)
        grid_b = pl.cdiv(B, b_tile)
        grid_t = pl.cdiv(S, row_tile)
    return b_tile, row_tile, grid_b, grid_t


def rgb2yuv(x, M=_RGB2YUV_M, *, target_rows=2048, ragged_tile_elems=1024 * _LANES):
    """Apply the 3x3 RGB->YUV channel mix to x of shape (B, 3, H, W)."""
    B, C, H, W = x.shape
    assert C == 3, "RGB2YUV expects 3 input channels"
    N = H * W
    itemsize = np.dtype(x.dtype).itemsize

    x_flat = x.reshape(B, 3, N)                       # free row-major view

    if N % _LANES == 0:
        # ---- Fast path: lane-dense (B, 3, S, 128) view; free reshape, no pad.
        S = N // _LANES
        x_r = x_flat.reshape(B, 3, S, _LANES)
        b_tile, row_tile, grid_b, grid_t = _plan_dense(B, S, itemsize, target_rows)
        block_bytes = b_tile * 3 * row_tile * _LANES * itemsize
        # Double-buffered in + out = 4 * block_bytes; add headroom, cap at
        # 48 MiB (v7x physical VMEM is 64 MiB), floor at 32 MiB (v5e's default
        # scoped VMEM is only 16 MiB, so always set this explicitly).
        vmem_limit = int(min(max(32 << 20, 4 * block_bytes + (16 << 20)), 48 << 20))

        out_r = pl.pallas_call(
            _make_lane_dense_kernel(M),
            out_shape=jax.ShapeDtypeStruct((B, 3, S, _LANES), x.dtype),
            grid=(grid_b, grid_t),
            in_specs=[
                pl.BlockSpec((b_tile, 3, row_tile, _LANES),
                             lambda ib, it: (ib, 0, it, 0)),
            ],
            out_specs=pl.BlockSpec((b_tile, 3, row_tile, _LANES),
                                   lambda ib, it: (ib, 0, it, 0)),
            compiler_params=pltpu.CompilerParams(
                dimension_semantics=("parallel", "parallel"),
                vmem_limit_bytes=vmem_limit,
            ),
        )(x_r)
        out = out_r.reshape(B, 3, N)
    else:
        # ---- Ragged path (H*W % 128 != 0): keep the free (B, 3, N) view and
        # let Pallas mask the partial final block.  Single HBM pass; avoids the
        # previous pad + slice round trips (up to ~3x traffic on ragged shapes).
        tile_n = N if N <= ragged_tile_elems else int(ragged_tile_elems)
        out = pl.pallas_call(
            _make_channel_sublane_kernel(M),
            out_shape=jax.ShapeDtypeStruct((B, 3, N), x.dtype),
            grid=(B, pl.cdiv(N, tile_n)),
            in_specs=[pl.BlockSpec((1, 3, tile_n), lambda ib, it: (ib, 0, it))],
            out_specs=pl.BlockSpec((1, 3, tile_n), lambda ib, it: (ib, 0, it)),
            compiler_params=pltpu.CompilerParams(
                dimension_semantics=("parallel", "parallel"),
                vmem_limit_bytes=32 << 20,
            ),
        )(x_flat)

    return out.reshape(B, 3, H, W)


if __name__ == "__main__":
    fwd = jax.jit(rgb2yuv)                 # jit so the free reshapes fuse away
    M = jnp.asarray(_RGB2YUV_M)

    key = jax.random.PRNGKey(0)
    x = jax.random.uniform(key, (2, 3, 16, 16), dtype=jnp.float32)
    out = jax.block_until_ready(fwd(x))
    ref = jnp.einsum("ck,bkhw->bchw", M, x)
    assert out.shape == (2, 3, 16, 16)
    assert jnp.allclose(out, ref, atol=1e-5, rtol=1e-5)

    # Ragged spatial size (H*W % 128 != 0): exercises the no-pad masked path.
    x2 = jax.random.uniform(jax.random.PRNGKey(1), (1, 3, 20, 20), dtype=jnp.float32)
    out2 = jax.block_until_ready(fwd(x2))
    ref2 = jnp.einsum("ck,bkhw->bchw", M, x2)
    assert out2.shape == (1, 3, 20, 20)
    assert jnp.allclose(out2, ref2, atol=1e-5, rtol=1e-5)

    print("KERNEL_OK")
</pallas_src>

<mosaic_0001>
module attributes {stable_mosaic.version = 11 : i64} {
  func.func @kernel(%arg0: i32, %arg1: i32, %arg2: memref<1x3x2x128xf32, #tpu.memory_space<vmem>>, %arg3: memref<1x3x2x128xf32, #tpu.memory_space<vmem>>) attributes {dimension_semantics = [#tpu.dimension_semantics<parallel>, #tpu.dimension_semantics<parallel>], iteration_bounds = array<i64: 2, 1>, scalar_prefetch = 0 : i64, scratch_operands = 0 : i64, tpu.core_type = #tpu.core_type<tc>, window_params = [{transform_indices = @transform_0, window_bounds = array<i64: 1, 3, 2, 128>}, {transform_indices = @transform_1, window_bounds = array<i64: 1, 3, 2, 128>}]} {
    %c0 = arith.constant 0 : index
    %c0_0 = arith.constant 0 : index
    %c0_1 = arith.constant 0 : index
    %c0_2 = arith.constant 0 : index
    %0 = vector.load %arg2[%c0, %c0_0, %c0_1, %c0_2] : memref<1x3x2x128xf32, #tpu.memory_space<vmem>>, vector<1x1x2x128xf32>
    %1 = vector.shape_cast %0 : vector<1x1x2x128xf32> to vector<1x2x128xf32>
    %c0_3 = arith.constant 0 : index
    %c1 = arith.constant 1 : index
    %c0_4 = arith.constant 0 : index
    %c0_5 = arith.constant 0 : index
    %2 = vector.load %arg2[%c0_3, %c1, %c0_4, %c0_5] : memref<1x3x2x128xf32, #tpu.memory_space<vmem>>, vector<1x1x2x128xf32>
    %3 = vector.shape_cast %2 : vector<1x1x2x128xf32> to vector<1x2x128xf32>
    %c0_6 = arith.constant 0 : index
    %c2 = arith.constant 2 : index
    %c0_7 = arith.constant 0 : index
    %c0_8 = arith.constant 0 : index
    %4 = vector.load %arg2[%c0_6, %c2, %c0_7, %c0_8] : memref<1x3x2x128xf32, #tpu.memory_space<vmem>>, vector<1x1x2x128xf32>
    %5 = vector.shape_cast %4 : vector<1x1x2x128xf32> to vector<1x2x128xf32>
    %cst = arith.constant 2.990000e-01 : f32
    %6 = vector.broadcast %cst : f32 to vector<1x2x128xf32>
    %7 = arith.mulf %6, %1 : vector<1x2x128xf32>
    %cst_9 = arith.constant 5.870000e-01 : f32
    %8 = vector.broadcast %cst_9 : f32 to vector<1x2x128xf32>
    %9 = arith.mulf %8, %3 : vector<1x2x128xf32>
    %10 = arith.addf %7, %9 : vector<1x2x128xf32>
    %cst_10 = arith.constant 1.140000e-01 : f32
    %11 = vector.broadcast %cst_10 : f32 to vector<1x2x128xf32>
    %12 = arith.mulf %11, %5 : vector<1x2x128xf32>
    %13 = arith.addf %10, %12 : vector<1x2x128xf32>
    %c0_11 = arith.constant 0 : index
    %c0_12 = arith.constant 0 : index
    %c0_13 = arith.constant 0 : index
    %c0_14 = arith.constant 0 : index
    %14 = vector.load %arg3[%c0_11, %c0_12, %c0_13, %c0_14] : memref<1x3x2x128xf32, #tpu.memory_space<vmem>>, vector<1x1x2x128xf32>
    %15 = vector.shape_cast %14 : vector<1x1x2x128xf32> to vector<1x2x128xf32>
    %16 = vector.shape_cast %13 : vector<1x2x128xf32> to vector<1x1x2x128xf32>
    tpu.vector_store %arg3[%c0_11, %c0_12, %c0_13, %c0_14], %16 {strides = array<i32>} : memref<1x3x2x128xf32, #tpu.memory_space<vmem>>, vector<1x1x2x128xf32>,
    %cst_15 = arith.constant -1.471300e-01 : f32
    %17 = vector.broadcast %cst_15 : f32 to vector<1x2x128xf32>
    %18 = arith.mulf %17, %1 : vector<1x2x128xf32>
    %cst_16 = arith.constant -2.888600e-01 : f32
    %19 = vector.broadcast %cst_16 : f32 to vector<1x2x128xf32>
    %20 = arith.mulf %19, %3 : vector<1x2x128xf32>
    %21 = arith.addf %18, %20 : vector<1x2x128xf32>
    %cst_17 = arith.constant 4.360000e-01 : f32
    %22 = vector.broadcast %cst_17 : f32 to vector<1x2x128xf32>
    %23 = arith.mulf %22, %5 : vector<1x2x128xf32>
    %24 = arith.addf %21, %23 : vector<1x2x128xf32>
    %c0_18 = arith.constant 0 : index
    %c1_19 = arith.constant 1 : index
    %c0_20 = arith.constant 0 : index
    %c0_21 = arith.constant 0 : index
    %25 = vector.load %arg3[%c0_18, %c1_19, %c0_20, %c0_21] : memref<1x3x2x128xf32, #tpu.memory_space<vmem>>, vector<1x1x2x128xf32>
    %26 = vector.shape_cast %25 : vector<1x1x2x128xf32> to vector<1x2x128xf32>
    %27 = vector.shape_cast %24 : vector<1x2x128xf32> to vector<1x1x2x128xf32>
    tpu.vector_store %arg3[%c0_18, %c1_19, %c0_20, %c0_21], %27 {strides = array<i32>} : memref<1x3x2x128xf32, #tpu.memory_space<vmem>>, vector<1x1x2x128xf32>,
    %cst_22 = arith.constant 6.150000e-01 : f32
    %28 = vector.broadcast %cst_22 : f32 to vector<1x2x128xf32>
    %29 = arith.mulf %28, %1 : vector<1x2x128xf32>
    %cst_23 = arith.constant -5.149900e-01 : f32
    %30 = vector.broadcast %cst_23 : f32 to vector<1x2x128xf32>
    %31 = arith.mulf %30, %3 : vector<1x2x128xf32>
    %32 = arith.addf %29, %31 : vector<1x2x128xf32>
    %cst_24 = arith.constant -1.000100e-01 : f32
    %33 = vector.broadcast %cst_24 : f32 to vector<1x2x128xf32>
    %34 = arith.mulf %33, %5 : vector<1x2x128xf32>
    %35 = arith.addf %32, %34 : vector<1x2x128xf32>
    %c0_25 = arith.constant 0 : index
    %c2_26 = arith.constant 2 : index
    %c0_27 = arith.constant 0 : index
    %c0_28 = arith.constant 0 : index
    %36 = vector.load %arg3[%c0_25, %c2_26, %c0_27, %c0_28] : memref<1x3x2x128xf32, #tpu.memory_space<vmem>>, vector<1x1x2x128xf32>
    %37 = vector.shape_cast %36 : vector<1x1x2x128xf32> to vector<1x2x128xf32>
    %38 = vector.shape_cast %35 : vector<1x2x128xf32> to vector<1x1x2x128xf32>
    tpu.vector_store %arg3[%c0_25, %c2_26, %c0_27, %c0_28], %38 {strides = array<i32>} : memref<1x3x2x128xf32, #tpu.memory_space<vmem>>, vector<1x1x2x128xf32>,
    return
  }
  func.func @transform_0(%arg0: i32, %arg1: i32) -> (i32, i32, i32, i32) {
    %c0_i32 = arith.constant 0 : i32
    %c0_i32_0 = arith.constant 0 : i32
    %c0_i32_1 = arith.constant 0 : i32
    return %arg0, %c0_i32, %arg1, %c0_i32_0 : i32, i32, i32, i32
  }
  func.func @transform_1(%arg0: i32, %arg1: i32) -> (i32, i32, i32, i32) {
    %c0_i32 = arith.constant 0 : i32
    %c0_i32_0 = arith.constant 0 : i32
    %c0_i32_1 = arith.constant 0 : i32
    return %arg0, %c0_i32, %arg1, %c0_i32_0 : i32, i32, i32, i32
  }
}

</mosaic_0001>

<llo_original>
// kernel: rgb2yuv.1
$region0: #{rgb2yuv.1}
  #allocation0 [shape = 'u32[]', space=smem, size = 0x4, offset = 0x4, fixed_abs, tag = 'smem constant byte address 0x4 - core index']
  #allocation1 [shape = 'u32[72,128]{1,0:T(1,128)}', space=vmem, size = 0x9000, scoped, tag = 'internal scratch']
  %s0 = inlined_call_operand.vmem [shape: f32[2,3,2,128], index: 0, kind: input, shape index: {}]
  %s1 = inlined_call_operand.vmem [shape: f32[2,3,2,128], index: 1, kind: output, shape index: {}]
  %s2 = sld [smem:[#allocation0]]
  $region37: #{rgb2yuv.1} parent=0
    _
  %s4 = ssub.s32 1, %s2
  %s5 = scalar_select 0, %s4, %s2
  loop: start=0, step=1, limit=4
  $region2: #{rgb2yuv.1} parent=0 // loop_pre_header
    _
  $region3: #{rgb2yuv.1} parent=0 // loop_header
    %s7 = sphi 0, %s11
    %p8 = scmp.ge.s32.totalorder %s7, 4
    %s14 = sphi 0, %s26
    %s15 = sphi 0, %s22
    %s16 = sphi 0, %s14
    %s17 = sphi 0, %s15
    %s18 = sphi 0, %s16
    %s19 = sphi 0, %s17
    %s31 = sphi 0, %s33
    %s34 = sphi 0, %s31
    %s35 = sphi 0, %s34
    %s51 = sphi 0, %s35
    %s59 = sphi 0, %s61
    %s62 = sphi 0, %s59
    %s63 = sphi 0, %s62
    %s79 = sphi 0, %s63
  $region4: #{rgb2yuv.1} parent=0 // loop_header_branch
    %10 = sbr.rel (%p8) target = $region8
  $region5: #{rgb2yuv.1} parent=0 // loop_body
    %s12 = ssub.s32 %s7, 1
    %s13 = ssub.s32 %s7, 2
    %s20 = sadd.s32 1, %s15
    %p21 = scmp.ge.s32.totalorder %s20, 1
    %s22 = scalar_select %p21, 0, %s20
    %s23 = sadd.s32 1, %s14
    %s24 = scalar_select %p21, %s23, %s14
    %p25 = scmp.ge.s32.totalorder %s24, 2
    %s26 = scalar_select %p25, 0, %s24
    %s27 = ssub.s32 %s14, %s26
    %s28 = ssub.s32 %s15, %s22
    %s29 = sor.u32 %s27, %s28
    %p30 = scmp.eq.s32.totalorder %s29, 0
    %s32 = sadd.s32 %s31, 1
    %s33 = scalar_select %p30, %s31, %s32
    %p36 = pneg %p30
    %p37 = scmp.eq.s32.totalorder %s7, 1
    %p38 = por %p36, %p37
    %p39 = scmp.ne.s32.totalorder %s31, %s34
    %p40 = scmp.eq.s32.totalorder %s7, 0
    %p41 = por %p39, %p40
    %p42 = scmp.ne.s32.totalorder %s31, %s34
    %p43 = scmp.eq.s32.totalorder %s12, 1
    %p44 = por %p42, %p43
    %p45 = scmp.ne.s32.totalorder %s34, %s35
    %p46 = scmp.eq.s32.totalorder %s12, 0
    %p47 = por %p45, %p46
    %p48 = scmp.ne.s32.totalorder %s34, %s35
    %p49 = scmp.eq.s32.totalorder %s13, 1
    %p50 = por %p48, %p49
    %p52 = scmp.ne.s32.totalorder %s35, %s51
    %p53 = scmp.eq.s32.totalorder %s13, 0
    %p54 = por %p52, %p53
    %s55 = ssub.s32 %s14, %s26
    %s56 = ssub.s32 %s15, %s22
    %s57 = sor.u32 %s55, %s56
    %p58 = scmp.eq.s32.totalorder %s57, 0
    %s60 = sadd.s32 %s59, 1
    %s61 = scalar_select %p58, %s59, %s60
    %p64 = pneg %p58
    %p65 = scmp.eq.s32.totalorder %s7, 1
    %p66 = por %p64, %p65
    %p67 = scmp.ne.s32.totalorder %s59, %s62
    %p68 = scmp.eq.s32.totalorder %s7, 0
    %p69 = por %p67, %p68
    %p70 = scmp.ne.s32.totalorder %s59, %s62
    %p71 = scmp.eq.s32.totalorder %s12, 1
    %p72 = por %p70, %p71
    %p73 = scmp.ne.s32.totalorder %s62, %s63
    %p74 = scmp.eq.s32.totalorder %s12, 0
    %p75 = por %p73, %p74
    %p76 = scmp.ne.s32.totalorder %s62, %s63
    %p77 = scmp.eq.s32.totalorder %s13, 1
    %p78 = por %p76, %p77
    %p80 = scmp.ne.s32.totalorder %s63, %s79
    %p81 = scmp.eq.s32.totalorder %s13, 0
    %p82 = por %p80, %p81
    %p83 = scmp.le.s32.totalorder 1, %s7
    %p84 = scmp.lt.s32.totalorder %s7, 3
    %p85 = pnand %p83, %p84
    %p86 = pneg %p85
    // Predicated region
    $region9: #{rgb2yuv.1} parent=5 // pred_check
      _
    $region10: #{rgb2yuv.1} parent=5 // pred_check_branch
      %88 = sbr.rel (%p85) target = $region12
    $region11: #{rgb2yuv.1} parent=5 // pred_region
      %s89 = ssub.s32 %s7, 1
    $region12: #{rgb2yuv.1} parent=5 // pred_fallthru
      _
    %p90 = scmp.lt.s32.totalorder %s7, 2
    // Predicated region
    $region13: #{rgb2yuv.1} parent=5 // pred_check
      %p91 = pneg %p90
    $region14: #{rgb2yuv.1} parent=5 // pred_check_branch
      %93 = sbr.rel (%p91) target = $region16
    $region15: #{rgb2yuv.1} parent=5 // pred_region
      // Predicated region
      $region17: #{rgb2yuv.1} parent=15 // pred_check
        %p94 = pneg %p41
      $region18: #{rgb2yuv.1} parent=15 // pred_check_branch
        %96 = sbr.rel (%p94) target = $region20
      $region19: #{rgb2yuv.1} parent=15 // pred_region
        %p97 = scmp.lt.s32.totalorder %s14, 1
        %s98 = scalar_select %p97, %s14, 1
        %p99 = scmp.lt.s32.totalorder %s15, 0
        %s100 = scalar_select %p99, %s15, 0
        %s101 = smul.addr %s98, 3
        %s102 = sadd.s32 %s100, %s101
        %s103 = smul.addr %s102, 2
        %s104 = scalar_lea.vmem %s0, %s103
      $region20: #{rgb2yuv.1} parent=15 // pred_fallthru
        _
    $region16: #{rgb2yuv.1} parent=5 // pred_fallthru
      _
    %p105 = scmp.le.s32.totalorder 1, %s7
    %p106 = scmp.lt.s32.totalorder %s7, 3
    %p107 = pnand %p105, %p106
    %p108 = pneg %p107
    // Predicated region
    $region21: #{rgb2yuv.1} parent=5 // pred_check
      _
    $region22: #{rgb2yuv.1} parent=5 // pred_check_branch
      %110 = sbr.rel (%p107) target = $region24
    $region23: #{rgb2yuv.1} parent=5 // pred_region
      %s111 = ssub.s32 %s7, 1
      %p112 = scmp.lt.s32.totalorder %s16, 1
      %s113 = scalar_select %p112, %s16, 1
      %p114 = scmp.lt.s32.totalorder %s17, 0
      %s115 = scalar_select %p114, %s17, 0
      %s116 = smul.addr %s113, 3
      %s117 = sadd.s32 %s115, %s116
      %s118 = smul.addr %s117, 2
      %s119 = scalar_lea.vmem %s0, %s118
      %p120 = pneg %p47
      %p121 = pneg %p44
      %p122 = pneg %p75
      %p123 = pneg %p72
      %p124 = scmp.lt.s32.totalorder %s16, 1
      %s125 = scalar_select %p124, %s16, 1
      %p126 = scmp.lt.s32.totalorder %s17, 0
      %s127 = scalar_select %p126, %s17, 0
      %s128 = smul.addr %s125, 3
      %s129 = sadd.s32 %s127, %s128
      %s130 = smul.addr %s129, 2
      %s131 = scalar_lea.vmem %s1, %s130
      %p132 = scmp.lt.s32.totalorder %s16, 1
      %s133 = scalar_select %p132, %s16, 1
      %p134 = scmp.lt.s32.totalorder %s17, 0
      %s135 = scalar_select %p134, %s17, 0
      %s136 = smul.addr %s133, 3
      %s137 = sadd.s32 %s135, %s136
      %s138 = smul.addr %s137, 2
      %s139 = scalar_lea.vmem %s0, %s138
      %p140 = scmp.lt.s32.totalorder %s16, 1
      %s141 = scalar_select %p140, %s16, 1
      %p142 = scmp.lt.s32.totalorder %s17, 0
      %s143 = scalar_select %p142, %s17, 0
      %s144 = smul.addr %s141, 3
      %s145 = sadd.s32 %s143, %s144
      %s146 = smul.addr %s145, 2
      %s147 = scalar_lea.vmem %s1, %s146
      %v148 = vld [vmem:[%s139] sm:$0x3]
      %s149 = scalar_lea.vmem %s139, 2
      %v150 = vld [vmem:[%s149] sm:$0x3]
      %s151 = scalar_lea.vmem %s139, 4
      %v152 = vld [vmem:[%s151] sm:$0x3]
      %v153 = vmul.f32 %v148, 0.299
      %v154 = vmul.f32 %v150, 0.587
      %v155 = vadd.f32 %v153, %v154
      %v156 = vmul.f32 %v152, 0.114
      %v157 = vadd.f32 %v155, %v156
      %158 = vst [vmem:[%s147] sm:$0x3] %v157
      %v159 = vmul.f32 %v148, -0.14713
      %v160 = vmul.f32 %v150, -0.28886
      %v161 = vadd.f32 %v159, %v160
      %v162 = vmul.f32 %v152, 0.436
      %v163 = vadd.f32 %v161, %v162
      %s164 = scalar_lea.vmem %s147, 2
      %165 = vst [vmem:[%s164] sm:$0x3] %v163
      %v166 = vmul.f32 %v148, 0.615
      %v167 = vmul.f32 %v150, -0.51499
      %v168 = vadd.f32 %v166, %v167
      %v169 = vmul.f32 %v152, -0.10001
      %v170 = vadd.f32 %v168, %v169
      %s171 = scalar_lea.vmem %s147, 4
      %172 = vst [vmem:[%s171] sm:$0x3] %v170
      %p173 = scmp.lt.s32.totalorder %s16, 1
      %s174 = scalar_select %p173, %s16, 1
      %p175 = scmp.lt.s32.totalorder %s17, 0
      %s176 = scalar_select %p175, %s17, 0
      %s177 = smul.addr %s174, 3
      %s178 = sadd.s32 %s176, %s177
      %s179 = smul.addr %s178, 2
      %s180 = scalar_lea.vmem %s1, %s179
      // Predicated region
      $region25: #{rgb2yuv.1} parent=23 // pred_check
        %p181 = pneg %p72
      $region26: #{rgb2yuv.1} parent=23 // pred_check_branch
        %183 = sbr.rel (%p181) target = $region28
      $region27: #{rgb2yuv.1} parent=23 // pred_region
        _
      $region28: #{rgb2yuv.1} parent=23 // pred_fallthru
        _
    $region24: #{rgb2yuv.1} parent=5 // pred_fallthru
      _
    %p184 = scmp.le.s32.totalorder 2, %s7
    // Predicated region
    $region29: #{rgb2yuv.1} parent=5 // pred_check
      %p185 = pneg %p184
    $region30: #{rgb2yuv.1} parent=5 // pred_check_branch
      %187 = sbr.rel (%p185) target = $region32
    $region31: #{rgb2yuv.1} parent=5 // pred_region
      %s188 = ssub.s32 %s7, 2
      // Predicated region
      $region33: #{rgb2yuv.1} parent=31 // pred_check
        %p189 = pneg %p78
      $region34: #{rgb2yuv.1} parent=31 // pred_check_branch
        %191 = sbr.rel (%p189) target = $region36
      $region35: #{rgb2yuv.1} parent=31 // pred_region
        %p192 = scmp.lt.s32.totalorder %s18, 1
        %s193 = scalar_select %p192, %s18, 1
        %p194 = scmp.lt.s32.totalorder %s19, 0
        %s195 = scalar_select %p194, %s19, 0
        %s196 = smul.addr %s193, 3
        %s197 = sadd.s32 %s195, %s196
        %s198 = smul.addr %s197, 2
        %s199 = scalar_lea.vmem %s1, %s198
      $region36: #{rgb2yuv.1} parent=31 // pred_fallthru
        _
    $region32: #{rgb2yuv.1} parent=5 // pred_fallthru
      _
  $region6: #{rgb2yuv.1} parent=0 // loop_footer
    %s11 = sadd.s32 1, %s7
  $region7: #{rgb2yuv.1} parent=0 // loop_footer_branch
    %6 = sbr.rel target = $region3
  $region8: #{rgb2yuv.1} parent=0 // loop_exit
    _

</llo_original>
